<compile_context>
chip_gen: v7x
topology: tpu7x:2x2x1
jax: 0.10.0
libtpu: 0.0.40
codegen_flags: <defaults>
</compile_context>

<pallas_src>
import jax
import jax.numpy as jnp
from jax.experimental import pallas as pl
from jax.experimental.pallas import tpu as pltpu


def qnet_kernel(xat_ref, w2t_ref, aux_ref, out_ref):
    # xat_ref: (8, TB)   rows: [x^T(3) | a^T(2) | ones | 0 | 0]
    # w2t_ref: (128,128) rows 0..49 = fc_q weight (50,128), rest zero
    # aux_ref: (128, 9)  cols: [Ws(3) | Wa(2) | b1 | b2_pad | w3_pad | bo@[0,8]]
    # out_ref: (1, TB)   q-values, batch in the lane dimension

    # Layer 1: fused fc_s/fc_a block-diagonal matmul.  aux[:, :8] includes the
    # b1 column (hit by the ones row) and the b2/w3 columns (hit by zero rows,
    # so they contribute nothing).
    h = jnp.tanh(
        jnp.dot(aux_ref[:, 0:8], xat_ref[...],
                preferred_element_type=jnp.float32))              # (128, TB)

    # Layer 2: q^T = tanh(Wq_pad @ h + bq_pad)  (rows 50..127 are tanh(0)=0).
    q = jnp.tanh(
        jnp.dot(w2t_ref[...], h, preferred_element_type=jnp.float32)
        + aux_ref[:, 6:7])                                        # (128, TB)

    # Layer 3: fc_out as VPU multiply + sublane reduce -> lane-dense (1, TB).
    out_ref[...] = (jnp.sum(q * aux_ref[:, 7:8], axis=0, keepdims=True)
                    + aux_ref[0:1, 8:9])


def qnet_forward(x, a, params, *, block_b=256):
    """x: (B, 3) f32, a: (B, 2) f32 -> (B, 1) f32."""
    assert block_b % 128 == 0
    B = x.shape[0]
    ws, bs, wa, ba, wq, bq, wo, bo = (
        params["ws"], params["bs"], params["wa"], params["ba"],
        params["wq"], params["bq"], params["wo"], params["bo"])

    # Batch tile: 256 lanes per block for large B, otherwise one full block
    # rounded up to a sublane multiple.
    if B >= block_b:
        TB = block_b
    else:
        TB = ((B + 7) // 8) * 8
    num_blocks = pl.cdiv(B, TB)
    Bp = num_blocks * TB

    # Packed, transposed input: (8, Bp) = [x^T | a^T | ones | 0 | 0], batch in
    # lanes, zero-padded to Bp columns.
    xat = jnp.zeros((8, Bp), jnp.float32)
    xat = xat.at[0:3, :B].set(x.T)
    xat = xat.at[3:5, :B].set(a.T)
    xat = xat.at[5, :B].set(1.0)

    # fc_q weight, transposed convention already matches the feature-major
    # formulation (q^T = Wq @ h), zero-padded to 128 output rows.
    w2t = jnp.zeros((128, 128), jnp.float32).at[0:50, :].set(wq)

    # Aux slab (128, 9):
    #   cols 0..2 : Ws (rows 0..63)      cols 3..4 : Wa (rows 64..127)
    #   col 5     : b1 = [bs; ba]        col 6     : bq zero-padded
    #   col 7     : fc_out weight row zero-padded
    #   [0, 8]    : fc_out bias scalar
    aux = jnp.zeros((128, 9), jnp.float32)
    aux = aux.at[0:64, 0:3].set(ws)
    aux = aux.at[64:128, 3:5].set(wa)
    aux = aux.at[:, 5].set(jnp.concatenate([bs, ba]))
    aux = aux.at[0:50, 6].set(bq)
    aux = aux.at[0:50, 7].set(wo[0])
    aux = aux.at[0, 8].set(bo[0])

    out = pl.pallas_call(
        qnet_kernel,
        out_shape=jax.ShapeDtypeStruct((1, Bp), jnp.float32),
        grid=(num_blocks,),
        in_specs=[
            pl.BlockSpec((8, TB), lambda i: (0, i)),       # packed input
            pl.BlockSpec((128, 128), lambda i: (0, 0)),    # resident fc_q
            pl.BlockSpec((128, 9), lambda i: (0, 0)),      # resident aux slab
        ],
        out_specs=pl.BlockSpec((1, TB), lambda i: (0, i)),
        compiler_params=pltpu.CompilerParams(
            dimension_semantics=("parallel",)),
    )(xat, w2t, aux)

    return out[0, :B].reshape(B, 1)


def init_params(key):
    """Deterministic synthetic init mirroring nn.Linear defaults and
    QNet.initialize() for fc_out (uniform +-0.003)."""
    ks = jax.random.split(key, 8)

    def linear_init(kw, kb, out_f, in_f):
        bound = 1.0 / jnp.sqrt(in_f)
        w = jax.random.uniform(kw, (out_f, in_f), jnp.float32, -bound, bound)
        b = jax.random.uniform(kb, (out_f,), jnp.float32, -bound, bound)
        return w, b

    ws, bs = linear_init(ks[0], ks[1], 64, 3)
    wa, ba = linear_init(ks[2], ks[3], 64, 2)
    wq, bq = linear_init(ks[4], ks[5], 50, 128)
    wo = jax.random.uniform(ks[6], (1, 50), jnp.float32, -0.003, 0.003)
    bo = jax.random.uniform(ks[7], (1,), jnp.float32, -0.003, 0.003)
    return dict(ws=ws, bs=bs, wa=wa, ba=ba, wq=wq, bq=bq, wo=wo, bo=bo)


def qnet_reference(x, a, p):
    h1 = jnp.tanh(x @ p["ws"].T + p["bs"])
    h2 = jnp.tanh(a @ p["wa"].T + p["ba"])
    cat = jnp.concatenate([h1, h2], axis=1)
    q = jnp.tanh(cat @ p["wq"].T + p["bq"])
    return q @ p["wo"].T + p["bo"]


if __name__ == "__main__":
    key = jax.random.PRNGKey(0)
    kx, ka, kp = jax.random.split(key, 3)

    params = init_params(kp)
    fwd = jax.jit(qnet_forward)

    # Small-batch check (grid of 1).
    B = 8
    x = jax.random.normal(kx, (B, 3), jnp.float32)   # state
    a = jax.random.normal(ka, (B, 2), jnp.float32)   # action
    out = jax.block_until_ready(fwd(x, a, params))
    ref = qnet_reference(x, a, params)
    assert out.shape == (B, 1)
    assert jnp.allclose(out, ref, atol=1e-4, rtol=1e-4), (out, ref)

    # Tiled path: multi-block grid with ragged-batch zero padding.
    B2 = 300
    x2 = jax.random.normal(kx, (B2, 3), jnp.float32)
    a2 = jax.random.normal(ka, (B2, 2), jnp.float32)
    out2 = jax.block_until_ready(fwd(x2, a2, params))
    ref2 = qnet_reference(x2, a2, params)
    assert out2.shape == (B2, 1)
    assert jnp.allclose(out2, ref2, atol=1e-4, rtol=1e-4)

    print("KERNEL_OK")
</pallas_src>

<mosaic_0001>
module attributes {stable_mosaic.version = 11 : i64} {
  func.func @qnet_kernel(%arg0: i32, %arg1: memref<8x8xf32, #tpu.memory_space<vmem>>, %arg2: memref<128x128xf32, #tpu.memory_space<vmem>>, %arg3: memref<128x9xf32, #tpu.memory_space<vmem>>, %arg4: memref<1x8xf32, #tpu.memory_space<vmem>>) attributes {dimension_semantics = [#tpu.dimension_semantics<parallel>], iteration_bounds = array<i64: 1>, scalar_prefetch = 0 : i64, scratch_operands = 0 : i64, tpu.core_type = #tpu.core_type<tc>, window_params = [{transform_indices = @transform_0, window_bounds = array<i64: 8, 8>}, {pipeline_mode = #tpu.pipeline_mode<synchronous>, transform_indices = @transform_1, window_bounds = array<i64: 128, 128>}, {pipeline_mode = #tpu.pipeline_mode<synchronous>, transform_indices = @transform_2, window_bounds = array<i64: 128, 9>}, {transform_indices = @transform_3, window_bounds = array<i64: 1, 8>}]} {
    %c0 = arith.constant 0 : index
    %c0_0 = arith.constant 0 : index
    %0 = vector.load %arg3[%c0, %c0_0] : memref<128x9xf32, #tpu.memory_space<vmem>>, vector<128x8xf32>
    %c0_1 = arith.constant 0 : index
    %c0_2 = arith.constant 0 : index
    %1 = vector.load %arg1[%c0_1, %c0_2] : memref<8x8xf32, #tpu.memory_space<vmem>>, vector<8x8xf32>
    %cst = arith.constant dense<0.000000e+00> : vector<128x8xf32>
    %2 = tpu.matmul %0, %1, %cst {dimension_numbers = #tpu.dot_dimension_numbers<[1], [0], [0], [1], [0, 0, 1, 1], [], []>} : vector<128x8xf32>, vector<8x8xf32>, vector<128x8xf32> -> vector<128x8xf32>
    %3 = math.tanh %2 : vector<128x8xf32>
    %c0_3 = arith.constant 0 : index
    %c0_4 = arith.constant 0 : index
    %4 = vector.load %arg2[%c0_3, %c0_4] : memref<128x128xf32, #tpu.memory_space<vmem>>, vector<128x128xf32>
    %cst_5 = arith.constant dense<0.000000e+00> : vector<128x8xf32>
    %5 = tpu.matmul %4, %3, %cst_5 {dimension_numbers = #tpu.dot_dimension_numbers<[1], [0], [0], [1], [0, 0, 1, 1], [], []>} : vector<128x128xf32>, vector<128x8xf32>, vector<128x8xf32> -> vector<128x8xf32>
    %c0_6 = arith.constant 0 : index
    %c6 = arith.constant 6 : index
    %6 = vector.load %arg3[%c0_6, %c6] : memref<128x9xf32, #tpu.memory_space<vmem>>, vector<128x1xf32>
    %7 = vector.broadcast %6 : vector<128x1xf32> to vector<128x8xf32>
    %8 = arith.addf %5, %7 : vector<128x8xf32>
    %9 = math.tanh %8 : vector<128x8xf32>
    %c0_7 = arith.constant 0 : index
    %c7 = arith.constant 7 : index
    %10 = vector.load %arg3[%c0_7, %c7] : memref<128x9xf32, #tpu.memory_space<vmem>>, vector<128x1xf32>
    %11 = vector.broadcast %10 : vector<128x1xf32> to vector<128x8xf32>
    %12 = arith.mulf %9, %11 : vector<128x8xf32>
    %cst_8 = arith.constant dense<0.000000e+00> : vector<8xf32>
    %13 = vector.multi_reduction <add>, %12, %cst_8 [0] : vector<128x8xf32> to vector<8xf32>
    %14 = vector.shape_cast %13 : vector<8xf32> to vector<1x8xf32>
    %c0_9 = arith.constant 0 : index
    %c8 = arith.constant 8 : index
    %15 = vector.load %arg3[%c0_9, %c8] : memref<128x9xf32, #tpu.memory_space<vmem>>, vector<1x1xf32>
    %16 = vector.broadcast %15 : vector<1x1xf32> to vector<1x8xf32>
    %17 = arith.addf %14, %16 : vector<1x8xf32>
    %c0_10 = arith.constant 0 : index
    %c0_11 = arith.constant 0 : index
    %18 = vector.load %arg4[%c0_10, %c0_11] : memref<1x8xf32, #tpu.memory_space<vmem>>, vector<1x8xf32>
    tpu.vector_store %arg4[%c0_10, %c0_11], %17 {strides = array<i32>} : memref<1x8xf32, #tpu.memory_space<vmem>>, vector<1x8xf32>,
    return
  }
  func.func @transform_0(%arg0: i32) -> (i32, i32) {
    %c0_i32 = arith.constant 0 : i32
    %c0_i32_0 = arith.constant 0 : i32
    return %c0_i32, %arg0 : i32, i32
  }
  func.func @transform_1(%arg0: i32) -> (i32, i32) {
    %c0_i32 = arith.constant 0 : i32
    %c0_i32_0 = arith.constant 0 : i32
    %c0_i32_1 = arith.constant 0 : i32
    return %c0_i32, %c0_i32_0 : i32, i32
  }
  func.func @transform_2(%arg0: i32) -> (i32, i32) {
    %c0_i32 = arith.constant 0 : i32
    %c0_i32_0 = arith.constant 0 : i32
    %c0_i32_1 = arith.constant 0 : i32
    return %c0_i32, %c0_i32_0 : i32, i32
  }
  func.func @transform_3(%arg0: i32) -> (i32, i32) {
    %c0_i32 = arith.constant 0 : i32
    %c0_i32_0 = arith.constant 0 : i32
    return %c0_i32, %arg0 : i32, i32
  }
}

</mosaic_0001>

<llo_original>
// kernel: qnet_forward.1
$region0: #{qnet_forward.1}
  #allocation0 [shape = 'u32[]', space=smem, size = 0x4, offset = 0x4, fixed_abs, tag = 'smem constant byte address 0x4 - core index']
  #allocation1 [shape = 'u32[144,128]{1,0:T(1,128)}', space=vmem, size = 0x12000, scoped, tag = 'internal scratch']
  %s0 = inlined_call_operand.vmem [shape: f32[8,8], index: 0, kind: input, shape index: {}]
  %s1 = inlined_call_operand.vmem [shape: f32[128,128], index: 1, kind: input, shape index: {}]
  %s2 = inlined_call_operand.vmem [shape: f32[128,9], index: 2, kind: input, shape index: {}]
  %s3 = inlined_call_operand.hbm [shape: f32[1,8], index: 3, kind: output, shape index: {}]
  %s4 = sld [smem:[#allocation0]]
  $region22: #{qnet_forward.1} parent=0
    _
  %s6 = ssub.s32 1, %s4
  %s7 = scalar_select 0, %s6, %s4
  $region1: #{qnet_forward.1} parent=0
    #allocation2 [shape = 'u8[512]{0}', space=vmem, size = 0x400, scoped, tag = 'output window, operand 0, single buffered']
    #allocation3 [shape = 's32[1]{0}', space=sflag, size = 0x4, scoped, tag = 'scoped memory for qnet_forward.1']
    %8 = vsyncpa [#allocation3], 0
    // Predicated region
    $region2: #{qnet_forward.1} parent=1 // pred_check
      _
    $region3: #{qnet_forward.1} parent=1 // pred_check_branch
      %10 = sbr.rel (0) target = $region5
    $region4: #{qnet_forward.1} parent=1 // pred_region
      _
    $region5: #{qnet_forward.1} parent=1 // pred_fallthru
      _
    // Predicated region
    $region6: #{qnet_forward.1} parent=1 // pred_check
      _
    $region7: #{qnet_forward.1} parent=1 // pred_check_branch
      %12 = sbr.rel (0) target = $region9
    $region8: #{qnet_forward.1} parent=1 // pred_region
      _
    $region9: #{qnet_forward.1} parent=1 // pred_fallthru
      _
    // Predicated region
    $region10: #{qnet_forward.1} parent=1 // pred_check
      _
    $region11: #{qnet_forward.1} parent=1 // pred_check_branch
      %14 = sbr.rel (0) target = $region13
    $region12: #{qnet_forward.1} parent=1 // pred_region
      _
    $region13: #{qnet_forward.1} parent=1 // pred_fallthru
      _
    %v15 = vld [vmem:[%s2] sm:$0xff]
    %v16 = vld [vmem:[%s2 + $0x8] sm:$0xff]
    %v17 = vld [vmem:[%s2 + $0x10] sm:$0xff]
    %v18 = vld [vmem:[%s2 + $0x18] sm:$0xff]
    %v19 = vld [vmem:[%s2 + $0x20] sm:$0xff]
    %v20 = vld [vmem:[%s2 + $0x28] sm:$0xff]
    %v21 = vld [vmem:[%s2 + $0x30] sm:$0xff]
    %v22 = vld [vmem:[%s2 + $0x38] sm:$0xff]
    %v23 = vld [vmem:[%s2 + $0x40] sm:$0xff]
    %v24 = vld [vmem:[%s2 + $0x48] sm:$0xff]
    %v25 = vld [vmem:[%s2 + $0x50] sm:$0xff]
    %v26 = vld [vmem:[%s2 + $0x58] sm:$0xff]
    %v27 = vld [vmem:[%s2 + $0x60] sm:$0xff]
    %v28 = vld [vmem:[%s2 + $0x68] sm:$0xff]
    %v29 = vld [vmem:[%s2 + $0x70] sm:$0xff]
    %v30 = vld [vmem:[%s2 + $0x78] sm:$0xff]
    %v31 = vld [vmem:[%s0] sm:$0xff]
    %vm32 = vcmask 64512
    %v34 = vsel %vm32, %v15, 0
    %v37 = vsel %vm32, %v16, 0
    %v40 = vsel %vm32, %v17, 0
    %v43 = vsel %vm32, %v18, 0
    %v46 = vsel %vm32, %v19, 0
    %v49 = vsel %vm32, %v20, 0
    %v52 = vsel %vm32, %v21, 0
    %v55 = vsel %vm32, %v22, 0
    %v58 = vsel %vm32, %v23, 0
    %v61 = vsel %vm32, %v24, 0
    %v64 = vsel %vm32, %v25, 0
    %v67 = vsel %vm32, %v26, 0
    %v70 = vsel %vm32, %v27, 0
    %v73 = vsel %vm32, %v28, 0
    %v76 = vsel %vm32, %v29, 0
    %v79 = vsel %vm32, %v30, 0
    %81 = vmatprep.subr.mxu0 0.0
    %82 = vmatpush1.msra.mxu0 %v31
    %83 = vmatprep.subr.mxu0 0.0
    %84 = vmatpush1.msra.mxu0 0.0
    %85 = vmatprep.subr.mxu0 0.0
    %86 = vmatpush1.msra.mxu0 0.0
    %87 = vmatprep.subr.mxu0 0.0
    %88 = vmatpush1.msra.mxu0 0.0
    %89 = vmatprep.subr.mxu0 0.0
    %90 = vmatpush1.msra.mxu0 0.0
    %91 = vmatprep.subr.mxu0 0.0
    %92 = vmatpush1.msra.mxu0 0.0
    %93 = vmatprep.subr.mxu0 0.0
    %94 = vmatpush1.msra.mxu0 0.0
    %95 = vmatprep.subr.mxu0 0.0
    %96 = vmatpush1.msra.mxu0 0.0
    %97 = vmatprep.subr.mxu0 0.0
    %98 = vmatpush1.msra.mxu0 0.0
    %99 = vmatprep.subr.mxu0 0.0
    %100 = vmatpush1.msra.mxu0 0.0
    %101 = vmatprep.subr.mxu0 0.0
    %102 = vmatpush1.msra.mxu0 0.0
    %103 = vmatprep.subr.mxu0 0.0
    %104 = vmatpush1.msra.mxu0 0.0
    %105 = vmatprep.subr.mxu0 0.0
    %106 = vmatpush1.msra.mxu0 0.0
    %107 = vmatprep.subr.mxu0 0.0
    %108 = vmatpush1.msra.mxu0 0.0
    %109 = vmatprep.subr.mxu0 0.0
    %110 = vmatpush1.msra.mxu0 0.0
    %111 = vmatprep.subr.mxu0 0.0
    %112 = vmatpush1.msra.mxu0 0.0
    %113 = vmatprep.subr.mxu0 0.0
    %114 = vmatpush1.msra.mxu0 0.0
    %115 = vmatprep.subr.mxu0 0.0
    %116 = vmatpush1.msra.mxu0 0.0
    %117 = vmatprep.subr.mxu0 0.0
    %118 = vmatpush1.msra.mxu0 0.0
    %119 = vmatprep.subr.mxu0 0.0
    %120 = vmatpush1.msra.mxu0 0.0
    %121 = vmatprep.subr.mxu0 0.0
    %122 = vmatpush1.msra.mxu0 0.0
    %123 = vmatprep.subr.mxu0 0.0
    %124 = vmatpush1.msra.mxu0 0.0
    %125 = vmatprep.subr.mxu0 0.0
    %126 = vmatpush1.msra.mxu0 0.0
    %127 = vmatprep.subr.mxu0 0.0
    %128 = vmatpush1.msra.mxu0 0.0
    %129 = vmatprep.subr.mxu0 0.0
    %130 = vmatpush1.msra.mxu0 0.0
    %131 = vmatprep.subr.mxu0 0.0
    %132 = vmatpush1.msra.mxu0 0.0
    %133 = vmatprep.subr.mxu0 0.0
    %134 = vmatpush1.msra.mxu0 0.0
    %135 = vmatprep.subr.mxu0 0.0
    %136 = vmatpush1.msra.mxu0 0.0
    %137 = vmatprep.subr.mxu0 0.0
    %138 = vmatpush1.msra.mxu0 0.0
    %139 = vmatprep.subr.mxu0 0.0
    %140 = vmatpush1.msra.mxu0 0.0
    %141 = vmatprep.subr.mxu0 0.0
    %142 = vmatpush1.msra.mxu0 0.0
    %143 = vmatprep.subr.mxu0 0.0
    %144 = vmatpush1.msra.mxu0 0.0
    %145 = vmatprep.mubr.f32.mxu0 0.0
    %146 = vmatmul.mubr.f32.gmra.mrb[0].mxu0 %v34
    %v147 = vpop.f32.mrb[0].mxu0
    %v148 = vadd.f32 0.0, %v147
    %v149 = vpop.f32.mrb[0].mxu0
    %150 = vmatprep.mubr.f32.mxu0 0.0
    %151 = vmatmul.mubr.f32.gmra.mrb[0].mxu0 %v37
    %v152 = vpop.f32.mrb[0].mxu0
    %v153 = vadd.f32 0.0, %v152
    %v154 = vpop.f32.mrb[0].mxu0
    %155 = vmatprep.mubr.f32.mxu0 0.0
    %156 = vmatmul.mubr.f32.gmra.mrb[0].mxu0 %v40
    %v157 = vpop.f32.mrb[0].mxu0
    %v158 = vadd.f32 0.0, %v157
    %v159 = vpop.f32.mrb[0].mxu0
    %160 = vmatprep.mubr.f32.mxu0 0.0
    %161 = vmatmul.mubr.f32.gmra.mrb[0].mxu0 %v43
    %v162 = vpop.f32.mrb[0].mxu0
    %v163 = vadd.f32 0.0, %v162
    %v164 = vpop.f32.mrb[0].mxu0
    %165 = vmatprep.mubr.f32.mxu0 0.0
    %166 = vmatmul.mubr.f32.gmra.mrb[0].mxu0 %v46
    %v167 = vpop.f32.mrb[0].mxu0
    %v168 = vadd.f32 0.0, %v167
    %v169 = vpop.f32.mrb[0].mxu0
    %170 = vmatprep.mubr.f32.mxu0 0.0
    %171 = vmatmul.mubr.f32.gmra.mrb[0].mxu0 %v49
    %v172 = vpop.f32.mrb[0].mxu0
    %v173 = vadd.f32 0.0, %v172
    %v174 = vpop.f32.mrb[0].mxu0
    %175 = vmatprep.mubr.f32.mxu0 0.0
    %176 = vmatmul.mubr.f32.gmra.mrb[0].mxu0 %v52
    %v177 = vpop.f32.mrb[0].mxu0
    %v178 = vadd.f32 0.0, %v177
    %v179 = vpop.f32.mrb[0].mxu0
    %180 = vmatprep.mubr.f32.mxu0 0.0
    %181 = vmatmul.mubr.f32.gmra.mrb[0].mxu0 %v55
    %v182 = vpop.f32.mrb[0].mxu0
    %v183 = vadd.f32 0.0, %v182
    %v184 = vpop.f32.mrb[0].mxu0
    %185 = vmatprep.mubr.f32.mxu0 0.0
    %186 = vmatmul.mubr.f32.gmra.mrb[0].mxu0 %v58
    %v187 = vpop.f32.mrb[0].mxu0
    %v188 = vadd.f32 0.0, %v187
    %v189 = vpop.f32.mrb[0].mxu0
    %190 = vmatprep.mubr.f32.mxu0 0.0
    %191 = vmatmul.mubr.f32.gmra.mrb[0].mxu0 %v61
    %v192 = vpop.f32.mrb[0].mxu0
    %v193 = vadd.f32 0.0, %v192
    %v194 = vpop.f32.mrb[0].mxu0
    %195 = vmatprep.mubr.f32.mxu0 0.0
    %196 = vmatmul.mubr.f32.gmra.mrb[0].mxu0 %v64
    %v197 = vpop.f32.mrb[0].mxu0
    %v198 = vadd.f32 0.0, %v197
    %v199 = vpop.f32.mrb[0].mxu0
    %200 = vmatprep.mubr.f32.mxu0 0.0
    %201 = vmatmul.mubr.f32.gmra.mrb[0].mxu0 %v67
    %v202 = vpop.f32.mrb[0].mxu0
    %v203 = vadd.f32 0.0, %v202
    %v204 = vpop.f32.mrb[0].mxu0
    %205 = vmatprep.mubr.f32.mxu0 0.0
    %206 = vmatmul.mubr.f32.gmra.mrb[0].mxu0 %v70
    %v207 = vpop.f32.mrb[0].mxu0
    %v208 = vadd.f32 0.0, %v207
    %v209 = vpop.f32.mrb[0].mxu0
    %210 = vmatprep.mubr.f32.mxu0 0.0
    %211 = vmatmul.mubr.f32.gmra.mrb[0].mxu0 %v73
    %v212 = vpop.f32.mrb[0].mxu0
    %v213 = vadd.f32 0.0, %v212
    %v214 = vpop.f32.mrb[0].mxu0
    %215 = vmatprep.mubr.f32.mxu0 0.0
    %216 = vmatmul.mubr.f32.gmra.mrb[0].mxu0 %v76
    %v217 = vpop.f32.mrb[0].mxu0
    %v218 = vadd.f32 0.0, %v217
    %v219 = vpop.f32.mrb[0].mxu0
    %220 = vmatprep.mubr.f32.mxu0 0.0
    %221 = vmatmul.mubr.f32.gmra.mrb[0].mxu0 %v79
    %v222 = vpop.f32.mrb[0].mxu0
    %v223 = vadd.f32 0.0, %v222
    %v224 = vpop.f32.mrb[0].mxu0
    %225 = vdwg.mxu0
    %v226 = vtanh.pop %v148
    %v227 = vtanh.pop %v153
    %v228 = vtanh.pop %v158
    %v229 = vtanh.pop %v163
    %v230 = vtanh.pop %v168
    %v231 = vtanh.pop %v173
    %v232 = vtanh.pop %v178
    %v233 = vtanh.pop %v183
    %v234 = vtanh.pop %v188
    %v235 = vtanh.pop %v193
    %v236 = vtanh.pop %v198
    %v237 = vtanh.pop %v203
    %v238 = vtanh.pop %v208
    %v239 = vtanh.pop %v213
    %v240 = vtanh.pop %v218
    %v241 = vtanh.pop %v223
    %v242 = vld [vmem:[%s1] sm:$0xff]
    %v243 = vld [vmem:[%s1 + $0x8] sm:$0xff]
    %v244 = vld [vmem:[%s1 + $0x10] sm:$0xff]
    %v245 = vld [vmem:[%s1 + $0x18] sm:$0xff]
    %v246 = vld [vmem:[%s1 + $0x20] sm:$0xff]
    %v247 = vld [vmem:[%s1 + $0x28] sm:$0xff]
    %v248 = vld [vmem:[%s1 + $0x30] sm:$0xff]
    %v249 = vld [vmem:[%s1 + $0x38] sm:$0xff]
    %v250 = vld [vmem:[%s1 + $0x40] sm:$0xff]
    %v251 = vld [vmem:[%s1 + $0x48] sm:$0xff]
    %v252 = vld [vmem:[%s1 + $0x50] sm:$0xff]
    %v253 = vld [vmem:[%s1 + $0x58] sm:$0xff]
    %v254 = vld [vmem:[%s1 + $0x60] sm:$0xff]
    %v255 = vld [vmem:[%s1 + $0x68] sm:$0xff]
    %v256 = vld [vmem:[%s1 + $0x70] sm:$0xff]
    %v257 = vld [vmem:[%s1 + $0x78] sm:$0xff]
    %258 = vset.pattern.permute.xlu0 6
    %259 = vperm.xlu0 %258, %v15
    %v260 = vpop.permute.xlu0 %259
    %262 = vset.pattern.permute.xlu0 6
    %263 = vperm.xlu0 %262, %v16
    %v264 = vpop.permute.xlu0 %263
    %266 = vset.pattern.permute.xlu0 6
    %267 = vperm.xlu0 %266, %v17
    %v268 = vpop.permute.xlu0 %267
    %270 = vset.pattern.permute.xlu0 6
    %271 = vperm.xlu0 %270, %v18
    %v272 = vpop.permute.xlu0 %271
    %274 = vset.pattern.permute.xlu0 6
    %275 = vperm.xlu0 %274, %v19
    %v276 = vpop.permute.xlu0 %275
    %278 = vset.pattern.permute.xlu0 6
    %279 = vperm.xlu0 %278, %v20
    %v280 = vpop.permute.xlu0 %279
    %282 = vset.pattern.permute.xlu0 6
    %283 = vperm.xlu0 %282, %v21
    %v284 = vpop.permute.xlu0 %283
    %286 = vset.pattern.permute.xlu0 6
    %287 = vperm.xlu0 %286, %v22
    %v288 = vpop.permute.xlu0 %287
    %290 = vset.pattern.permute.xlu0 6
    %291 = vperm.xlu0 %290, %v23
    %v292 = vpop.permute.xlu0 %291
    %294 = vset.pattern.permute.xlu0 6
    %295 = vperm.xlu0 %294, %v24
    %v296 = vpop.permute.xlu0 %295
    %298 = vset.pattern.permute.xlu0 6
    %299 = vperm.xlu0 %298, %v25
    %v300 = vpop.permute.xlu0 %299
    %302 = vset.pattern.permute.xlu0 6
    %303 = vperm.xlu0 %302, %v26
    %v304 = vpop.permute.xlu0 %303
    %306 = vset.pattern.permute.xlu0 6
    %307 = vperm.xlu0 %306, %v27
    %v308 = vpop.permute.xlu0 %307
    %310 = vset.pattern.permute.xlu0 6
    %311 = vperm.xlu0 %310, %v28
    %v312 = vpop.permute.xlu0 %311
    %314 = vset.pattern.permute.xlu0 6
    %315 = vperm.xlu0 %314, %v29
    %v316 = vpop.permute.xlu0 %315
    %318 = vset.pattern.permute.xlu0 6
    %319 = vperm.xlu0 %318, %v30
    %v320 = vpop.permute.xlu0 %319
    %322 = vmatprep.subr.mxu0 0.0
    %323 = vmatpush1.msra.mxu0 %v226
    %324 = vmatprep.subr.mxu0 0.0
    %325 = vmatpush1.msra.mxu0 %v227
    %326 = vmatprep.subr.mxu0 0.0
    %327 = vmatpush1.msra.mxu0 %v228
    %328 = vmatprep.subr.mxu0 0.0
    %329 = vmatpush1.msra.mxu0 %v229
    %330 = vmatprep.subr.mxu0 0.0
    %331 = vmatpush1.msra.mxu0 %v230
    %332 = vmatprep.subr.mxu0 0.0
    %333 = vmatpush1.msra.mxu0 %v231
    %334 = vmatprep.subr.mxu0 0.0
    %335 = vmatpush1.msra.mxu0 %v232
    %336 = vmatprep.subr.mxu0 0.0
    %337 = vmatpush1.msra.mxu0 %v233
    %338 = vmatprep.subr.mxu0 0.0
    %339 = vmatpush1.msra.mxu0 %v234
    %340 = vmatprep.subr.mxu0 0.0
    %341 = vmatpush1.msra.mxu0 %v235
    %342 = vmatprep.subr.mxu0 0.0
    %343 = vmatpush1.msra.mxu0 %v236
    %344 = vmatprep.subr.mxu0 0.0
    %345 = vmatpush1.msra.mxu0 %v237
    %346 = vmatprep.subr.mxu0 0.0
    %347 = vmatpush1.msra.mxu0 %v238
    %348 = vmatprep.subr.mxu0 0.0
    %349 = vmatpush1.msra.mxu0 %v239
    %350 = vmatprep.subr.mxu0 0.0
    %351 = vmatpush1.msra.mxu0 %v240
    %352 = vmatprep.subr.mxu0 0.0
    %353 = vmatpush1.msra.mxu0 %v241
    %354 = vmatprep.subr.mxu0 0.0
    %355 = vmatpush1.msra.mxu0 0.0
    %356 = vmatprep.subr.mxu0 0.0
    %357 = vmatpush1.msra.mxu0 0.0
    %358 = vmatprep.subr.mxu0 0.0
    %359 = vmatpush1.msra.mxu0 0.0
    %360 = vmatprep.subr.mxu0 0.0
    %361 = vmatpush1.msra.mxu0 0.0
    %362 = vmatprep.subr.mxu0 0.0
    %363 = vmatpush1.msra.mxu0 0.0
    %364 = vmatprep.subr.mxu0 0.0
    %365 = vmatpush1.msra.mxu0 0.0
    %366 = vmatprep.subr.mxu0 0.0
    %367 = vmatpush1.msra.mxu0 0.0
    %368 = vmatprep.subr.mxu0 0.0
    %369 = vmatpush1.msra.mxu0 0.0
    %370 = vmatprep.subr.mxu0 0.0
    %371 = vmatpush1.msra.mxu0 0.0
    %372 = vmatprep.subr.mxu0 0.0
    %373 = vmatpush1.msra.mxu0 0.0
    %374 = vmatprep.subr.mxu0 0.0
    %375 = vmatpush1.msra.mxu0 0.0
    %376 = vmatprep.subr.mxu0 0.0
    %377 = vmatpush1.msra.mxu0 0.0
    %378 = vmatprep.subr.mxu0 0.0
    %379 = vmatpush1.msra.mxu0 0.0
    %380 = vmatprep.subr.mxu0 0.0
    %381 = vmatpush1.msra.mxu0 0.0
    %382 = vmatprep.subr.mxu0 0.0
    %383 = vmatpush1.msra.mxu0 0.0
    %384 = vmatprep.subr.mxu0 0.0
    %385 = vmatpush1.msra.mxu0 0.0
    %386 = vmatprep.mubr.f32.mxu0 0.0
    %387 = vmatmul.mubr.f32.gmra.mrb[0].mxu0 %v242
    %v388 = vpop.f32.mrb[0].mxu0
    %v389 = vadd.f32 %v260, %v388
    %v390 = vpop.f32.mrb[0].mxu0
    %391 = vmatprep.mubr.f32.mxu0 0.0
    %392 = vmatmul.mubr.f32.gmra.mrb[0].mxu0 %v243
    %v393 = vpop.f32.mrb[0].mxu0
    %v394 = vadd.f32 %v264, %v393
    %v395 = vpop.f32.mrb[0].mxu0
    %396 = vmatprep.mubr.f32.mxu0 0.0
    %397 = vmatmul.mubr.f32.gmra.mrb[0].mxu0 %v244
    %v398 = vpop.f32.mrb[0].mxu0
    %v399 = vadd.f32 %v268, %v398
    %v400 = vpop.f32.mrb[0].mxu0
    %401 = vmatprep.mubr.f32.mxu0 0.0
    %402 = vmatmul.mubr.f32.gmra.mrb[0].mxu0 %v245
    %v403 = vpop.f32.mrb[0].mxu0
    %v404 = vadd.f32 %v272, %v403
    %v405 = vpop.f32.mrb[0].mxu0
    %406 = vmatprep.mubr.f32.mxu0 0.0
    %407 = vmatmul.mubr.f32.gmra.mrb[0].mxu0 %v246
    %v408 = vpop.f32.mrb[0].mxu0
    %v409 = vadd.f32 %v276, %v408
    %v410 = vpop.f32.mrb[0].mxu0
    %411 = vmatprep.mubr.f32.mxu0 0.0
    %412 = vmatmul.mubr.f32.gmra.mrb[0].mxu0 %v247
    %v413 = vpop.f32.mrb[0].mxu0
    %v414 = vadd.f32 %v280, %v413
    %v415 = vpop.f32.mrb[0].mxu0
    %416 = vmatprep.mubr.f32.mxu0 0.0
    %417 = vmatmul.mubr.f32.gmra.mrb[0].mxu0 %v248
    %v418 = vpop.f32.mrb[0].mxu0
    %v419 = vadd.f32 %v284, %v418
    %v420 = vpop.f32.mrb[0].mxu0
    %421 = vmatprep.mubr.f32.mxu0 0.0
    %422 = vmatmul.mubr.f32.gmra.mrb[0].mxu0 %v249
    %v423 = vpop.f32.mrb[0].mxu0
    %v424 = vadd.f32 %v288, %v423
    %v425 = vpop.f32.mrb[0].mxu0
    %426 = vmatprep.mubr.f32.mxu0 0.0
    %427 = vmatmul.mubr.f32.gmra.mrb[0].mxu0 %v250
    %v428 = vpop.f32.mrb[0].mxu0
    %v429 = vadd.f32 %v292, %v428
    %v430 = vpop.f32.mrb[0].mxu0
    %431 = vmatprep.mubr.f32.mxu0 0.0
    %432 = vmatmul.mubr.f32.gmra.mrb[0].mxu0 %v251
    %v433 = vpop.f32.mrb[0].mxu0
    %v434 = vadd.f32 %v296, %v433
    %v435 = vpop.f32.mrb[0].mxu0
    %436 = vmatprep.mubr.f32.mxu0 0.0
    %437 = vmatmul.mubr.f32.gmra.mrb[0].mxu0 %v252
    %v438 = vpop.f32.mrb[0].mxu0
    %v439 = vadd.f32 %v300, %v438
    %v440 = vpop.f32.mrb[0].mxu0
    %441 = vmatprep.mubr.f32.mxu0 0.0
    %442 = vmatmul.mubr.f32.gmra.mrb[0].mxu0 %v253
    %v443 = vpop.f32.mrb[0].mxu0
    %v444 = vadd.f32 %v304, %v443
    %v445 = vpop.f32.mrb[0].mxu0
    %446 = vmatprep.mubr.f32.mxu0 0.0
    %447 = vmatmul.mubr.f32.gmra.mrb[0].mxu0 %v254
    %v448 = vpop.f32.mrb[0].mxu0
    %v449 = vadd.f32 %v308, %v448
    %v450 = vpop.f32.mrb[0].mxu0
    %451 = vmatprep.mubr.f32.mxu0 0.0
    %452 = vmatmul.mubr.f32.gmra.mrb[0].mxu0 %v255
    %v453 = vpop.f32.mrb[0].mxu0
    %v454 = vadd.f32 %v312, %v453
    %v455 = vpop.f32.mrb[0].mxu0
    %456 = vmatprep.mubr.f32.mxu0 0.0
    %457 = vmatmul.mubr.f32.gmra.mrb[0].mxu0 %v256
    %v458 = vpop.f32.mrb[0].mxu0
    %v459 = vadd.f32 %v316, %v458
    %v460 = vpop.f32.mrb[0].mxu0
    %461 = vmatprep.mubr.f32.mxu0 0.0
    %462 = vmatmul.mubr.f32.gmra.mrb[0].mxu0 %v257
    %v463 = vpop.f32.mrb[0].mxu0
    %v464 = vadd.f32 %v320, %v463
    %v465 = vpop.f32.mrb[0].mxu0
    %466 = vdwg.mxu0
    %v467 = vtanh.pop %v389
    %v468 = vtanh.pop %v394
    %v469 = vtanh.pop %v399
    %v470 = vtanh.pop %v404
    %v471 = vtanh.pop %v409
    %v472 = vtanh.pop %v414
    %v473 = vtanh.pop %v419
    %v474 = vtanh.pop %v424
    %v475 = vtanh.pop %v429
    %v476 = vtanh.pop %v434
    %v477 = vtanh.pop %v439
    %v478 = vtanh.pop %v444
    %v479 = vtanh.pop %v449
    %v480 = vtanh.pop %v454
    %v481 = vtanh.pop %v459
    %v482 = vtanh.pop %v464
    %483 = vset.pattern.permute.xlu0 7
    %484 = vperm.xlu0 %483, %v15
    %v485 = vpop.permute.xlu0 %484
    %487 = vset.pattern.permute.xlu0 7
    %488 = vperm.xlu0 %487, %v16
    %v489 = vpop.permute.xlu0 %488
    %491 = vset.pattern.permute.xlu0 7
    %492 = vperm.xlu0 %491, %v17
    %v493 = vpop.permute.xlu0 %492
    %495 = vset.pattern.permute.xlu0 7
    %496 = vperm.xlu0 %495, %v18
    %v497 = vpop.permute.xlu0 %496
    %499 = vset.pattern.permute.xlu0 7
    %500 = vperm.xlu0 %499, %v19
    %v501 = vpop.permute.xlu0 %500
    %503 = vset.pattern.permute.xlu0 7
    %504 = vperm.xlu0 %503, %v20
    %v505 = vpop.permute.xlu0 %504
    %507 = vset.pattern.permute.xlu0 7
    %508 = vperm.xlu0 %507, %v21
    %v509 = vpop.permute.xlu0 %508
    %511 = vset.pattern.permute.xlu0 7
    %512 = vperm.xlu0 %511, %v22
    %v513 = vpop.permute.xlu0 %512
    %515 = vset.pattern.permute.xlu0 7
    %516 = vperm.xlu0 %515, %v23
    %v517 = vpop.permute.xlu0 %516
    %519 = vset.pattern.permute.xlu0 7
    %520 = vperm.xlu0 %519, %v24
    %v521 = vpop.permute.xlu0 %520
    %523 = vset.pattern.permute.xlu0 7
    %524 = vperm.xlu0 %523, %v25
    %v525 = vpop.permute.xlu0 %524
    %527 = vset.pattern.permute.xlu0 7
    %528 = vperm.xlu0 %527, %v26
    %v529 = vpop.permute.xlu0 %528
    %531 = vset.pattern.permute.xlu0 7
    %532 = vperm.xlu0 %531, %v27
    %v533 = vpop.permute.xlu0 %532
    %535 = vset.pattern.permute.xlu0 7
    %536 = vperm.xlu0 %535, %v28
    %v537 = vpop.permute.xlu0 %536
    %539 = vset.pattern.permute.xlu0 7
    %540 = vperm.xlu0 %539, %v29
    %v541 = vpop.permute.xlu0 %540
    %543 = vset.pattern.permute.xlu0 7
    %544 = vperm.xlu0 %543, %v30
    %v545 = vpop.permute.xlu0 %544
    %v547 = vmul.f32 %v467, %v485
    %v548 = vmul.f32 %v468, %v489
    %v549 = vmul.f32 %v469, %v493
    %v550 = vmul.f32 %v470, %v497
    %v551 = vmul.f32 %v471, %v501
    %v552 = vmul.f32 %v472, %v505
    %v553 = vmul.f32 %v473, %v509
    %v554 = vmul.f32 %v474, %v513
    %v555 = vmul.f32 %v475, %v517
    %v556 = vmul.f32 %v476, %v521
    %v557 = vmul.f32 %v477, %v525
    %v558 = vmul.f32 %v478, %v529
    %v559 = vmul.f32 %v479, %v533
    %v560 = vmul.f32 %v480, %v537
    %v561 = vmul.f32 %v481, %v541
    %v562 = vmul.f32 %v482, %v545
    %v563 = vsel %vm32, %v547, 0.0
    %v564 = vsel %vm32, %v548, 0.0
    %v565 = vadd.f32 %v563, %v564
    %v566 = vsel %vm32, %v549, 0.0
    %v567 = vadd.f32 %v565, %v566
    %v568 = vsel %vm32, %v550, 0.0
    %v569 = vadd.f32 %v567, %v568
    %v570 = vsel %vm32, %v551, 0.0
    %v571 = vadd.f32 %v569, %v570
    %v572 = vsel %vm32, %v552, 0.0
    %v573 = vadd.f32 %v571, %v572
    %v574 = vsel %vm32, %v553, 0.0
    %v575 = vadd.f32 %v573, %v574
    %v576 = vsel %vm32, %v554, 0.0
    %v577 = vadd.f32 %v575, %v576
    %v578 = vsel %vm32, %v555, 0.0
    %v579 = vadd.f32 %v577, %v578
    %v580 = vsel %vm32, %v556, 0.0
    %v581 = vadd.f32 %v579, %v580
    %v582 = vsel %vm32, %v557, 0.0
    %v583 = vadd.f32 %v581, %v582
    %v584 = vsel %vm32, %v558, 0.0
    %v585 = vadd.f32 %v583, %v584
    %v586 = vsel %vm32, %v559, 0.0
    %v587 = vadd.f32 %v585, %v586
    %v588 = vsel %vm32, %v560, 0.0
    %v589 = vadd.f32 %v587, %v588
    %v590 = vsel %vm32, %v561, 0.0
    %v591 = vadd.f32 %v589, %v590
    %v592 = vsel %vm32, %v562, 0.0
    %v593 = vadd.f32 %v591, %v592
    %v594 = vrot.slane %v593, 4
    %v595 = vadd.f32 %v593, %v594
    %v596 = vrot.slane %v595, 2
    %v597 = vadd.f32 %v595, %v596
    %v598 = vrot.slane %v597, 1
    %v599 = vadd.f32 %v597, %v598
    %v600 = vld [vmem:[%s2] sm:$0x1]
    %602 = vset.pattern.permute.xlu0 8
    %603 = vperm.xlu0 %602, %v600
    %v604 = vpop.permute.xlu0 %603
    %v606 = vadd.f32 %v599, %v604
    %vm607 = vcmask 57344
    %608 = vst.msk [vmem:[#allocation2] sm:$0x1] %vm607, %v606
    // Predicated region
    $region14: #{qnet_forward.1} parent=1 // pred_check
      _
    $region15: #{qnet_forward.1} parent=1 // pred_check_branch
      %610 = sbr.rel (0) target = $region17
    $region16: #{qnet_forward.1} parent=1 // pred_region
      %s612 = ssub.s32 16, 16
      %613 = vsyncadd [#allocation3], %s612
      %s615 = sshll.u32 [#allocation2], 4
      %s616 = int_to_ptr.vmem [resolvable:$true] %s615
      %618 = dma.vmem_to_hbm [thread:$0]  %s616, 16, %s3, [#allocation3]
    $region17: #{qnet_forward.1} parent=1 // pred_fallthru
      _
    // Predicated region
    $region18: #{qnet_forward.1} parent=1 // pred_check
      _
    $region19: #{qnet_forward.1} parent=1 // pred_check_branch
      %620 = sbr.rel (0) target = $region21
    $region20: #{qnet_forward.1} parent=1 // pred_region
      %621 = dma.done [#allocation3], 16
    $region21: #{qnet_forward.1} parent=1 // pred_fallthru
      _
    %622 = vsyncpa [#allocation3], 1

</llo_original>
